<compile_context>
chip_gen: v7x
topology: tpu7x:2x2x1
jax: 0.10.0
libtpu: 0.0.40
codegen_flags: <defaults>
</compile_context>

<pallas_src>
import jax
import jax.numpy as jnp
import numpy as np
from jax.experimental import pallas as pl
from jax.experimental.pallas import tpu as pltpu


# --------------------------- fused forward kernel ---------------------------
def fused_net8x8_kernel(org_ref, pre_ref, qp_ref,
                        w1_ref, w2a_ref, w2b_ref, w3_ref, w4_ref,
                        b1_ref, b2_ref, b3_ref, wq_ref, b4_ref,
                        out_ref):
    f32 = jnp.float32
    bf16 = jnp.bfloat16

    org = org_ref[...].astype(bf16)                       # (bn, 64)
    pre = pre_ref[...].astype(bf16)                       # (bn, 64)

    # Stage 1: NC1 3x3 / pad-1 conv + ReLU as one dense pixel->pixel (64, 64)
    # bf16 MXU contraction with f32 accumulation.
    t = jnp.maximum(
        jnp.dot(org, w1_ref[...], preferred_element_type=f32) + b1_ref[...],
        0.0).astype(bf16)                                 # (bn, 64)

    # Stage 2: NC2 4x4 / stride-4 conv on cat(T, pre) + ReLU, split into the
    # T-channel and pre-channel halves of the (128, 16) matrix (no concat).
    b = jnp.maximum(
        jnp.dot(t, w2a_ref[...], preferred_element_type=f32)
        + jnp.dot(pre, w2b_ref[...], preferred_element_type=f32)
        + b2_ref[...],
        0.0).astype(bf16)                                 # (bn, 16)

    # Stage 3: NC3_1 | NC3_2 (2x2 / stride-2 == full-window reduction) fused
    # into one (16, 18) contraction + ReLU.
    tt = jnp.maximum(
        jnp.dot(b, w3_ref[...], preferred_element_type=f32) + b3_ref[...],
        0.0).astype(bf16)                                 # (bn, 18) = [T1 | T2]

    # FC1 on BOTH branches via a block-diagonal (18, 4) matrix.  The qp affine
    # (qp/64 - 0.5) is pre-folded into wq/b4, so the epilogue is one FMA.
    out_ref[...] = (jnp.dot(tt, w4_ref[...], preferred_element_type=f32)
                    + qp_ref[...] * wq_ref[...] + b4_ref[...])   # (bn, 4)


# ------------------ conv -> dense-matrix weight preparation -----------------
def _dense_weights(params):
    (w1, b1, w2, b2, w31, b31, w32, b32, fc1_w, fc1_b, _fc2_w, _fc2_b) = params
    f32, bf16 = jnp.float32, jnp.bfloat16

    # NC1 (1->1, 3x3, pad 1) as a (64, 64) matrix: row = in pixel h*8+w,
    # col = out pixel oh*8+ow.  Built from 9 shifted identity kroneckers.
    k33 = w1[0, 0].astype(f32)
    w1m = jnp.zeros((64, 64), f32)
    for dy in range(3):
        for dx in range(3):
            w1m = w1m + k33[dy, dx] * jnp.kron(
                jnp.eye(8, k=1 - dy, dtype=f32), jnp.eye(8, k=1 - dx, dtype=f32))
    b1row = jnp.tile(b1.astype(f32).reshape(1, 1), (1, 64))   # (1, 64) VMEM row

    # NC2 (2->4, 4x4, stride 4) as a (128, 16) matrix:
    # row = (ic, h, w) flattened, col = oc*4 + ph*2 + pw.
    eye2 = jnp.eye(2, dtype=f32)
    w2m = jnp.einsum('oikl,pa,qb->ipkqloab', w2.astype(f32), eye2, eye2)
    w2m = w2m.reshape(128, 16)
    w2a, w2b = w2m[:64], w2m[64:]                             # T half / pre half
    b2v = jnp.repeat(b2.astype(f32), 4).reshape(1, 16)

    # NC3_1 | NC3_2 (4->9, 2x2, stride 2) as one (16, 18) matrix.
    w3 = jnp.concatenate([w31.astype(f32).reshape(9, 16).T,
                          w32.astype(f32).reshape(9, 16).T], axis=1)  # (16, 18)
    b3 = jnp.concatenate([b31, b32]).astype(f32).reshape(1, 18)

    # FC1 applied to both branches: block-diag (18, 4); qp column separate.
    fcw9 = fc1_w[:, :9].T.astype(f32)                         # (9, 2)
    z = jnp.zeros((9, 2), f32)
    w4 = jnp.concatenate(
        [jnp.concatenate([fcw9, z], axis=1),
         jnp.concatenate([z, fcw9], axis=1)], axis=0)         # (18, 4)
    wq_col = jnp.tile(fc1_w[:, 9].astype(f32), 2).reshape(1, 4)
    b4 = jnp.tile(fc1_b.astype(f32), 2).reshape(1, 4)
    # Fold qp/64 - 0.5 into the constants: out += qp * wq2 + b4p.
    wq2 = wq_col * (1.0 / 64.0)
    b4p = b4 - 0.5 * wq_col

    # bf16 MXU operands; biases / qp constants stay f32 (post-accumulation).
    return (w1m.astype(bf16), w2a.astype(bf16), w2b.astype(bf16),
            w3.astype(bf16), w4.astype(bf16),
            b1row, b2v, b3, wq2, b4p)


# ------------------------------ forward factory ------------------------------
def make_net8x8_forward(params, block_n=4096, vmem_limit_bytes=None):
    """Build the dense weights once and return a jitted forward(org, pre, qp)."""
    weights = _dense_weights(params)   # hoisted out of the per-call path
    f32 = jnp.float32

    def _call(org_f, pre_f, qp_f, bn, grid_n):
        w1m, w2a, w2b, w3, w4, b1row, b2v, b3, wq2, b4p = weights

        def batch_spec(d):
            return pl.BlockSpec((bn, d), lambda i: (i, 0))

        def const_spec(shape):
            return pl.BlockSpec(shape, lambda i, _n=len(shape): (0,) * _n)

        # Lane-padded VMEM budget: each (bn, <=128) f32 slab costs bn*512 B;
        # ~16 MiB of double-buffered I/O at bn=4096 plus matmul temporaries.
        vmem = vmem_limit_bytes
        if vmem is None:
            vmem = min(120 * 1024 * 1024,
                       max(32 * 1024 * 1024, bn * 512 * 24))

        return pl.pallas_call(
            fused_net8x8_kernel,
            out_shape=jax.ShapeDtypeStruct((grid_n * bn, 4), f32),
            grid=(grid_n,),
            in_specs=[
                batch_spec(64), batch_spec(64), batch_spec(1),    # org, pre, qp
                const_spec((64, 64)), const_spec((64, 16)),       # w1m, w2a
                const_spec((64, 16)), const_spec((16, 18)),       # w2b, w3
                const_spec((18, 4)),                              # w4
                const_spec((1, 64)), const_spec((1, 16)),         # b1, b2
                const_spec((1, 18)), const_spec((1, 4)),          # b3, wq'
                const_spec((1, 4)),                               # b4'
            ],
            out_specs=batch_spec(4),
            compiler_params=pltpu.CompilerParams(
                dimension_semantics=("parallel",),
                vmem_limit_bytes=vmem),
        )(org_f, pre_f, qp_f, w1m, w2a, w2b, w3, w4, b1row, b2v, b3, wq2, b4p)

    def forward(org, pre, qp):
        N = org.shape[0]
        # Flatten NCHW (C=1) inputs to (N, 64): metadata-only, no HBM pass.
        org_f = org.reshape(N, 64).astype(f32)
        pre_f = pre.reshape(N, 64).astype(f32)
        qp_f = qp.reshape(N, 1).astype(f32)

        # Batch tile: big enough to amortize per-step overhead, shrunk for
        # medium batches so grid >= 2 (both v7x TensorCores get work).
        bn = max(8, (int(block_n) // 8) * 8)
        if 1024 <= N < 2 * bn:
            bn = max(8, ((N // 2) // 8) * 8)
        grid_n = N // bn
        n_main = grid_n * bn

        outs = []
        if grid_n > 0:
            # Main call reads the original (unpadded) arrays; the grid simply
            # stops at the last full tile.
            outs.append(_call(org_f, pre_f, qp_f, bn, grid_n))
        if n_main < N:
            # Ragged tail: one full-extent block over the remaining rows only
            # (no whole-input jnp.pad; only <bn rows are re-sliced).
            outs.append(_call(org_f[n_main:], pre_f[n_main:], qp_f[n_main:],
                              N - n_main, 1))
        out = outs[0] if len(outs) == 1 else jnp.concatenate(outs, axis=0)
        return out[:, :2], out[:, 2:]

    return jax.jit(forward)


def net8x8_forward(org, pre, qp, params, block_n=4096):
    """One-off convenience wrapper (rebuilds weights; prefer the factory)."""
    return make_net8x8_forward(params, block_n=block_n)(org, pre, qp)


# ------------------------------ pure-JAX reference ---------------------------
def ref_forward(org, pre, qp, params):
    (w1, b1, w2, b2, w31, b31, w32, b32, fc1_w, fc1_b, _w, _b) = params

    def conv(x, w, b, stride, pad):
        y = jax.lax.conv_general_dilated(
            x, w, window_strides=(stride, stride),
            padding=[(pad, pad), (pad, pad)],
            dimension_numbers=('NCHW', 'OIHW', 'NCHW'))
        return y + b.reshape(1, -1, 1, 1)

    T = jax.nn.relu(conv(org, w1, b1, 1, 1))
    T = jax.nn.relu(conv(jnp.concatenate([T, pre], axis=1), w2, b2, 4, 0))
    T1 = jax.nn.relu(conv(T, w31, b31, 2, 0))[:, :, 0, 0]
    T2 = jax.nn.relu(conv(T, w32, b32, 2, 0))[:, :, 0, 0]
    q = qp / 64.0 - 0.5
    x1 = jnp.concatenate([T1, q], axis=1) @ fc1_w.T + fc1_b
    x2 = jnp.concatenate([T2, q], axis=1) @ fc1_w.T + fc1_b
    return x1, x2


if __name__ == "__main__":
    f32 = jnp.float32

    # Deterministic synthetic parameters (shapes from Net8x8.__init__).
    kp = jax.random.split(jax.random.PRNGKey(123), 12)

    def init(k, shape, scale):
        return jax.random.normal(k, shape, f32) * scale

    w1 = init(kp[0], (1, 1, 3, 3), 0.3);  b1 = init(kp[1], (1,), 0.1)
    w2 = init(kp[2], (4, 2, 4, 4), 0.2);  b2 = init(kp[3], (4,), 0.1)
    w31 = init(kp[4], (9, 4, 2, 2), 0.2); b31 = init(kp[5], (9,), 0.1)
    w32 = init(kp[6], (9, 4, 2, 2), 0.2); b32 = init(kp[7], (9,), 0.1)
    fc1_w = init(kp[8], (2, 10), 0.3);    fc1_b = init(kp[9], (2,), 0.1)
    fc2_w = init(kp[10], (2, 10), 0.3)    # FC2 unused in forward(), as in PyTorch
    fc2_b = init(kp[11], (2,), 0.1)
    params = (w1, b1, w2, b2, w31, b31, w32, b32, fc1_w, fc1_b, fc2_w, fc2_b)

    # Small deterministic inputs (batch=2, 8x8 spatial as implied by Net8x8).
    kin = jax.random.split(jax.random.PRNGKey(0), 3)
    org = jax.random.uniform(kin[0], (2, 1, 8, 8), f32)
    pre = jax.random.uniform(kin[1], (2, 1, 8, 8), f32)
    qp = jax.random.uniform(kin[2], (2, 1), f32) * 51.0 + 10.0

    fwd = make_net8x8_forward(params)          # weights built once, jitted
    x1, x2 = fwd(org, pre, qp)
    x1 = jax.block_until_ready(x1)
    x2 = jax.block_until_ready(x2)
    r1, r2 = ref_forward(org, pre, qp, params)
    # bf16 MXU operands (f32 accumulation) => loosened tolerance vs f32 ref.
    np.testing.assert_allclose(np.asarray(x1), np.asarray(r1), rtol=5e-2, atol=5e-2)
    np.testing.assert_allclose(np.asarray(x2), np.asarray(r2), rtol=5e-2, atol=5e-2)

    # Also exercise the batch-tiled path: grid > 1 plus a ragged tail block
    # (no whole-input padding copies).
    kin2 = jax.random.split(jax.random.PRNGKey(1), 3)
    N2 = 600
    org2 = jax.random.uniform(kin2[0], (N2, 1, 8, 8), f32)
    pre2 = jax.random.uniform(kin2[1], (N2, 1, 8, 8), f32)
    qp2 = jax.random.uniform(kin2[2], (N2, 1), f32) * 51.0 + 10.0
    fwd_tiled = make_net8x8_forward(params, block_n=256)
    y1, y2 = fwd_tiled(org2, pre2, qp2)
    y1 = jax.block_until_ready(y1)
    y2 = jax.block_until_ready(y2)
    s1, s2 = ref_forward(org2, pre2, qp2, params)
    np.testing.assert_allclose(np.asarray(y1), np.asarray(s1), rtol=5e-2, atol=5e-2)
    np.testing.assert_allclose(np.asarray(y2), np.asarray(s2), rtol=5e-2, atol=5e-2)

    print("KERNEL_OK")
</pallas_src>

<mosaic_0001>
module attributes {stable_mosaic.version = 11 : i64} {
  func.func @fused_net8x8_kernel(%arg0: i32, %arg1: memref<2x64xf32, #tpu.memory_space<vmem>>, %arg2: memref<2x64xf32, #tpu.memory_space<vmem>>, %arg3: memref<2x1xf32, #tpu.memory_space<vmem>>, %arg4: memref<64x64xbf16, #tpu.memory_space<vmem>>, %arg5: memref<64x16xbf16, #tpu.memory_space<vmem>>, %arg6: memref<64x16xbf16, #tpu.memory_space<vmem>>, %arg7: memref<16x18xbf16, #tpu.memory_space<vmem>>, %arg8: memref<18x4xbf16, #tpu.memory_space<vmem>>, %arg9: memref<1x64xf32, #tpu.memory_space<vmem>>, %arg10: memref<1x16xf32, #tpu.memory_space<vmem>>, %arg11: memref<1x18xf32, #tpu.memory_space<vmem>>, %arg12: memref<1x4xf32, #tpu.memory_space<vmem>>, %arg13: memref<1x4xf32, #tpu.memory_space<vmem>>, %arg14: memref<2x4xf32, #tpu.memory_space<vmem>>) attributes {dimension_semantics = [#tpu.dimension_semantics<parallel>], iteration_bounds = array<i64: 1>, scalar_prefetch = 0 : i64, scratch_operands = 0 : i64, tpu.core_type = #tpu.core_type<tc>, window_params = [{transform_indices = @transform_0, window_bounds = array<i64: 2, 64>}, {transform_indices = @transform_1, window_bounds = array<i64: 2, 64>}, {transform_indices = @transform_2, window_bounds = array<i64: 2, 1>}, {pipeline_mode = #tpu.pipeline_mode<synchronous>, transform_indices = @transform_3, window_bounds = array<i64: 64, 64>}, {pipeline_mode = #tpu.pipeline_mode<synchronous>, transform_indices = @transform_4, window_bounds = array<i64: 64, 16>}, {pipeline_mode = #tpu.pipeline_mode<synchronous>, transform_indices = @transform_5, window_bounds = array<i64: 64, 16>}, {pipeline_mode = #tpu.pipeline_mode<synchronous>, transform_indices = @transform_6, window_bounds = array<i64: 16, 18>}, {pipeline_mode = #tpu.pipeline_mode<synchronous>, transform_indices = @transform_7, window_bounds = array<i64: 18, 4>}, {pipeline_mode = #tpu.pipeline_mode<synchronous>, transform_indices = @transform_8, window_bounds = array<i64: 1, 64>}, {pipeline_mode = #tpu.pipeline_mode<synchronous>, transform_indices = @transform_9, window_bounds = array<i64: 1, 16>}, {pipeline_mode = #tpu.pipeline_mode<synchronous>, transform_indices = @transform_10, window_bounds = array<i64: 1, 18>}, {pipeline_mode = #tpu.pipeline_mode<synchronous>, transform_indices = @transform_11, window_bounds = array<i64: 1, 4>}, {pipeline_mode = #tpu.pipeline_mode<synchronous>, transform_indices = @transform_12, window_bounds = array<i64: 1, 4>}, {transform_indices = @transform_13, window_bounds = array<i64: 2, 4>}]} {
    %c0 = arith.constant 0 : index
    %c0_0 = arith.constant 0 : index
    %0 = vector.load %arg1[%c0, %c0_0] : memref<2x64xf32, #tpu.memory_space<vmem>>, vector<2x64xf32>
    %1 = arith.truncf %0 : vector<2x64xf32> to vector<2x64xbf16>
    %c0_1 = arith.constant 0 : index
    %c0_2 = arith.constant 0 : index
    %2 = vector.load %arg2[%c0_1, %c0_2] : memref<2x64xf32, #tpu.memory_space<vmem>>, vector<2x64xf32>
    %3 = arith.truncf %2 : vector<2x64xf32> to vector<2x64xbf16>
    %c0_3 = arith.constant 0 : index
    %c0_4 = arith.constant 0 : index
    %4 = vector.load %arg4[%c0_3, %c0_4] : memref<64x64xbf16, #tpu.memory_space<vmem>>, vector<64x64xbf16>
    %cst = arith.constant dense<0.000000e+00> : vector<2x64xf32>
    %5 = tpu.matmul %1, %4, %cst {dimension_numbers = #tpu.dot_dimension_numbers<[1], [0], [0], [1], [0, 0, 1, 1], [], []>} : vector<2x64xbf16>, vector<64x64xbf16>, vector<2x64xf32> -> vector<2x64xf32>
    %c0_5 = arith.constant 0 : index
    %c0_6 = arith.constant 0 : index
    %6 = vector.load %arg9[%c0_5, %c0_6] : memref<1x64xf32, #tpu.memory_space<vmem>>, vector<1x64xf32>
    %7 = vector.broadcast %6 : vector<1x64xf32> to vector<2x64xf32>
    %8 = arith.addf %5, %7 : vector<2x64xf32>
    %cst_7 = arith.constant 0.000000e+00 : f32
    %9 = vector.broadcast %cst_7 : f32 to vector<2x64xf32>
    %10 = arith.maximumf %8, %9 : vector<2x64xf32>
    %11 = arith.truncf %10 : vector<2x64xf32> to vector<2x64xbf16>
    %c0_8 = arith.constant 0 : index
    %c0_9 = arith.constant 0 : index
    %12 = vector.load %arg5[%c0_8, %c0_9] : memref<64x16xbf16, #tpu.memory_space<vmem>>, vector<64x16xbf16>
    %cst_10 = arith.constant dense<0.000000e+00> : vector<2x16xf32>
    %13 = tpu.matmul %11, %12, %cst_10 {dimension_numbers = #tpu.dot_dimension_numbers<[1], [0], [0], [1], [0, 0, 1, 1], [], []>} : vector<2x64xbf16>, vector<64x16xbf16>, vector<2x16xf32> -> vector<2x16xf32>
    %c0_11 = arith.constant 0 : index
    %c0_12 = arith.constant 0 : index
    %14 = vector.load %arg6[%c0_11, %c0_12] : memref<64x16xbf16, #tpu.memory_space<vmem>>, vector<64x16xbf16>
    %cst_13 = arith.constant dense<0.000000e+00> : vector<2x16xf32>
    %15 = tpu.matmul %3, %14, %cst_13 {dimension_numbers = #tpu.dot_dimension_numbers<[1], [0], [0], [1], [0, 0, 1, 1], [], []>} : vector<2x64xbf16>, vector<64x16xbf16>, vector<2x16xf32> -> vector<2x16xf32>
    %16 = arith.addf %13, %15 : vector<2x16xf32>
    %c0_14 = arith.constant 0 : index
    %c0_15 = arith.constant 0 : index
    %17 = vector.load %arg10[%c0_14, %c0_15] : memref<1x16xf32, #tpu.memory_space<vmem>>, vector<1x16xf32>
    %18 = vector.broadcast %17 : vector<1x16xf32> to vector<2x16xf32>
    %19 = arith.addf %16, %18 : vector<2x16xf32>
    %cst_16 = arith.constant 0.000000e+00 : f32
    %20 = vector.broadcast %cst_16 : f32 to vector<2x16xf32>
    %21 = arith.maximumf %19, %20 : vector<2x16xf32>
    %22 = arith.truncf %21 : vector<2x16xf32> to vector<2x16xbf16>
    %c0_17 = arith.constant 0 : index
    %c0_18 = arith.constant 0 : index
    %23 = vector.load %arg7[%c0_17, %c0_18] : memref<16x18xbf16, #tpu.memory_space<vmem>>, vector<16x18xbf16>
    %cst_19 = arith.constant dense<0.000000e+00> : vector<2x18xf32>
    %24 = tpu.matmul %22, %23, %cst_19 {dimension_numbers = #tpu.dot_dimension_numbers<[1], [0], [0], [1], [0, 0, 1, 1], [], []>} : vector<2x16xbf16>, vector<16x18xbf16>, vector<2x18xf32> -> vector<2x18xf32>
    %c0_20 = arith.constant 0 : index
    %c0_21 = arith.constant 0 : index
    %25 = vector.load %arg11[%c0_20, %c0_21] : memref<1x18xf32, #tpu.memory_space<vmem>>, vector<1x18xf32>
    %26 = vector.broadcast %25 : vector<1x18xf32> to vector<2x18xf32>
    %27 = arith.addf %24, %26 : vector<2x18xf32>
    %cst_22 = arith.constant 0.000000e+00 : f32
    %28 = vector.broadcast %cst_22 : f32 to vector<2x18xf32>
    %29 = arith.maximumf %27, %28 : vector<2x18xf32>
    %30 = arith.truncf %29 : vector<2x18xf32> to vector<2x18xbf16>
    %c0_23 = arith.constant 0 : index
    %c0_24 = arith.constant 0 : index
    %31 = vector.load %arg8[%c0_23, %c0_24] : memref<18x4xbf16, #tpu.memory_space<vmem>>, vector<18x4xbf16>
    %cst_25 = arith.constant dense<0.000000e+00> : vector<2x4xf32>
    %32 = tpu.matmul %30, %31, %cst_25 {dimension_numbers = #tpu.dot_dimension_numbers<[1], [0], [0], [1], [0, 0, 1, 1], [], []>} : vector<2x18xbf16>, vector<18x4xbf16>, vector<2x4xf32> -> vector<2x4xf32>
    %c0_26 = arith.constant 0 : index
    %c0_27 = arith.constant 0 : index
    %33 = vector.load %arg3[%c0_26, %c0_27] : memref<2x1xf32, #tpu.memory_space<vmem>>, vector<2x1xf32>
    %c0_28 = arith.constant 0 : index
    %c0_29 = arith.constant 0 : index
    %34 = vector.load %arg12[%c0_28, %c0_29] : memref<1x4xf32, #tpu.memory_space<vmem>>, vector<1x4xf32>
    %35 = vector.broadcast %33 : vector<2x1xf32> to vector<2x4xf32>
    %36 = vector.broadcast %34 : vector<1x4xf32> to vector<2x4xf32>
    %37 = arith.mulf %35, %36 : vector<2x4xf32>
    %38 = arith.addf %32, %37 : vector<2x4xf32>
    %c0_30 = arith.constant 0 : index
    %c0_31 = arith.constant 0 : index
    %39 = vector.load %arg13[%c0_30, %c0_31] : memref<1x4xf32, #tpu.memory_space<vmem>>, vector<1x4xf32>
    %40 = vector.broadcast %39 : vector<1x4xf32> to vector<2x4xf32>
    %41 = arith.addf %38, %40 : vector<2x4xf32>
    %c0_32 = arith.constant 0 : index
    %c0_33 = arith.constant 0 : index
    %42 = vector.load %arg14[%c0_32, %c0_33] : memref<2x4xf32, #tpu.memory_space<vmem>>, vector<2x4xf32>
    tpu.vector_store %arg14[%c0_32, %c0_33], %41 {strides = array<i32>} : memref<2x4xf32, #tpu.memory_space<vmem>>, vector<2x4xf32>,
    return
  }
  func.func @transform_0(%arg0: i32) -> (i32, i32) {
    %c0_i32 = arith.constant 0 : i32
    %c0_i32_0 = arith.constant 0 : i32
    return %arg0, %c0_i32 : i32, i32
  }
  func.func @transform_1(%arg0: i32) -> (i32, i32) {
    %c0_i32 = arith.constant 0 : i32
    %c0_i32_0 = arith.constant 0 : i32
    return %arg0, %c0_i32 : i32, i32
  }
  func.func @transform_2(%arg0: i32) -> (i32, i32) {
    %c0_i32 = arith.constant 0 : i32
    %c0_i32_0 = arith.constant 0 : i32
    return %arg0, %c0_i32 : i32, i32
  }
  func.func @transform_3(%arg0: i32) -> (i32, i32) {
    %c0_i32 = arith.constant 0 : i32
    %c0_i32_0 = arith.constant 0 : i32
    %c0_i32_1 = arith.constant 0 : i32
    return %c0_i32, %c0_i32_0 : i32, i32
  }
  func.func @transform_4(%arg0: i32) -> (i32, i32) {
    %c0_i32 = arith.constant 0 : i32
    %c0_i32_0 = arith.constant 0 : i32
    %c0_i32_1 = arith.constant 0 : i32
    return %c0_i32, %c0_i32_0 : i32, i32
  }
  func.func @transform_5(%arg0: i32) -> (i32, i32) {
    %c0_i32 = arith.constant 0 : i32
    %c0_i32_0 = arith.constant 0 : i32
    %c0_i32_1 = arith.constant 0 : i32
    return %c0_i32, %c0_i32_0 : i32, i32
  }
  func.func @transform_6(%arg0: i32) -> (i32, i32) {
    %c0_i32 = arith.constant 0 : i32
    %c0_i32_0 = arith.constant 0 : i32
    %c0_i32_1 = arith.constant 0 : i32
    return %c0_i32, %c0_i32_0 : i32, i32
  }
  func.func @transform_7(%arg0: i32) -> (i32, i32) {
    %c0_i32 = arith.constant 0 : i32
    %c0_i32_0 = arith.constant 0 : i32
    %c0_i32_1 = arith.constant 0 : i32
    return %c0_i32, %c0_i32_0 : i32, i32
  }
  func.func @transform_8(%arg0: i32) -> (i32, i32) {
    %c0_i32 = arith.constant 0 : i32
    %c0_i32_0 = arith.constant 0 : i32
    %c0_i32_1 = arith.constant 0 : i32
    return %c0_i32, %c0_i32_0 : i32, i32
  }
  func.func @transform_9(%arg0: i32) -> (i32, i32) {
    %c0_i32 = arith.constant 0 : i32
    %c0_i32_0 = arith.constant 0 : i32
    %c0_i32_1 = arith.constant 0 : i32
    return %c0_i32, %c0_i32_0 : i32, i32
  }
  func.func @transform_10(%arg0: i32) -> (i32, i32) {
    %c0_i32 = arith.constant 0 : i32
    %c0_i32_0 = arith.constant 0 : i32
    %c0_i32_1 = arith.constant 0 : i32
    return %c0_i32, %c0_i32_0 : i32, i32
  }
  func.func @transform_11(%arg0: i32) -> (i32, i32) {
    %c0_i32 = arith.constant 0 : i32
    %c0_i32_0 = arith.constant 0 : i32
    %c0_i32_1 = arith.constant 0 : i32
    return %c0_i32, %c0_i32_0 : i32, i32
  }
  func.func @transform_12(%arg0: i32) -> (i32, i32) {
    %c0_i32 = arith.constant 0 : i32
    %c0_i32_0 = arith.constant 0 : i32
    %c0_i32_1 = arith.constant 0 : i32
    return %c0_i32, %c0_i32_0 : i32, i32
  }
  func.func @transform_13(%arg0: i32) -> (i32, i32) {
    %c0_i32 = arith.constant 0 : i32
    %c0_i32_0 = arith.constant 0 : i32
    return %arg0, %c0_i32 : i32, i32
  }
}

</mosaic_0001>

<llo_original>
// kernel: forward.1
$region0: #{forward.1}
  #allocation0 [shape = 'u32[]', space=smem, size = 0x4, offset = 0x4, fixed_abs, tag = 'smem constant byte address 0x4 - core index']
  #allocation1 [shape = 'u32[144,128]{1,0:T(1,128)}', space=vmem, size = 0x12000, scoped, tag = 'internal scratch']
  %s0 = inlined_call_operand.vmem [shape: f32[2,64], index: 0, kind: input, shape index: {}]
  %s1 = inlined_call_operand.vmem [shape: f32[2,64], index: 1, kind: input, shape index: {}]
  %s2 = inlined_call_operand.vmem [shape: f32[2,1], index: 2, kind: input, shape index: {}]
  %s3 = inlined_call_operand.hbm [shape: bf16[64,64], index: 3, kind: input, shape index: {}]
  %s4 = inlined_call_operand.vmem [shape: bf16[64,16], index: 4, kind: input, shape index: {}]
  %s5 = inlined_call_operand.vmem [shape: bf16[64,16], index: 5, kind: input, shape index: {}]
  %s6 = inlined_call_operand.vmem [shape: bf16[16,18], index: 6, kind: input, shape index: {}]
  %s7 = inlined_call_operand.hbm [shape: bf16[18,4], index: 7, kind: input, shape index: {}]
  %s8 = inlined_call_operand.vmem [shape: f32[1,64], index: 8, kind: input, shape index: {}]
  %s9 = inlined_call_operand.vmem [shape: f32[1,16], index: 9, kind: input, shape index: {}]
  %s10 = inlined_call_operand.vmem [shape: f32[1,18], index: 10, kind: input, shape index: {}]
  %s11 = inlined_call_operand.vmem [shape: f32[1,4], index: 11, kind: input, shape index: {}]
  %s12 = inlined_call_operand.vmem [shape: f32[1,4], index: 12, kind: input, shape index: {}]
  %s13 = inlined_call_operand.vmem [shape: f32[2,4], index: 13, kind: output, shape index: {}]
  %s14 = sld [smem:[#allocation0]]
  $region70: #{forward.1} parent=0
    _
  %s16 = ssub.s32 1, %s14
  %s17 = scalar_select 0, %s16, %s14
  $region1: #{forward.1} parent=0
    #allocation2 [shape = 'u8[16384]{0}', space=vmem, size = 0x4000, scoped, tag = 'input window, operand 3, single buffered']
    #allocation3 [shape = 's32[1]{0}', space=sflag, size = 0x4, scoped, tag = 'scoped memory for forward.1']
    #allocation4 [shape = 'u8[6144]{0}', space=vmem, size = 0x1800, scoped, tag = 'input window, operand 7, single buffered']
    #allocation5 [shape = 's32[1]{0}', space=sflag, size = 0x4, scoped, tag = 'scoped memory for forward.1']
    %18 = vsyncpa [#allocation3], 0
    %19 = vsyncpa [#allocation5], 0
    // Predicated region
    $region2: #{forward.1} parent=1 // pred_check
      _
    $region3: #{forward.1} parent=1 // pred_check_branch
      %21 = sbr.rel (0) target = $region5
    $region4: #{forward.1} parent=1 // pred_region
      _
    $region5: #{forward.1} parent=1 // pred_fallthru
      _
    // Predicated region
    $region6: #{forward.1} parent=1 // pred_check
      _
    $region7: #{forward.1} parent=1 // pred_check_branch
      %23 = sbr.rel (0) target = $region9
    $region8: #{forward.1} parent=1 // pred_region
      _
    $region9: #{forward.1} parent=1 // pred_fallthru
      _
    // Predicated region
    $region10: #{forward.1} parent=1 // pred_check
      _
    $region11: #{forward.1} parent=1 // pred_check_branch
      %25 = sbr.rel (0) target = $region13
    $region12: #{forward.1} parent=1 // pred_region
      _
    $region13: #{forward.1} parent=1 // pred_fallthru
      _
    // Predicated region
    $region14: #{forward.1} parent=1 // pred_check
      _
    $region15: #{forward.1} parent=1 // pred_check_branch
      %27 = sbr.rel (0) target = $region17
    $region16: #{forward.1} parent=1 // pred_region
      %s29 = ssub.s32 512, 512
      %30 = vsyncadd [#allocation3], %s29
      %s31 = sshll.u32 [#allocation2], 4
      %s32 = int_to_ptr.vmem [resolvable:$true] %s31
      %37 = dma.hbm_to_vmem [thread:$0]  %s3, 512, %s32, [#allocation3], 64, 64, 4
    $region17: #{forward.1} parent=1 // pred_fallthru
      _
    // Predicated region
    $region18: #{forward.1} parent=1 // pred_check
      _
    $region19: #{forward.1} parent=1 // pred_check_branch
      %39 = sbr.rel (0) target = $region21
    $region20: #{forward.1} parent=1 // pred_region
      _
    $region21: #{forward.1} parent=1 // pred_fallthru
      _
    // Predicated region
    $region22: #{forward.1} parent=1 // pred_check
      _
    $region23: #{forward.1} parent=1 // pred_check_branch
      %41 = sbr.rel (0) target = $region25
    $region24: #{forward.1} parent=1 // pred_region
      _
    $region25: #{forward.1} parent=1 // pred_fallthru
      _
    // Predicated region
    $region26: #{forward.1} parent=1 // pred_check
      _
    $region27: #{forward.1} parent=1 // pred_check_branch
      %43 = sbr.rel (0) target = $region29
    $region28: #{forward.1} parent=1 // pred_region
      _
    $region29: #{forward.1} parent=1 // pred_fallthru
      _
    // Predicated region
    $region30: #{forward.1} parent=1 // pred_check
      _
    $region31: #{forward.1} parent=1 // pred_check_branch
      %45 = sbr.rel (0) target = $region33
    $region32: #{forward.1} parent=1 // pred_region
      %s47 = ssub.s32 192, 192
      %48 = vsyncadd [#allocation5], %s47
      %s49 = sshll.u32 [#allocation4], 4
      %s50 = int_to_ptr.vmem [resolvable:$true] %s49
      %55 = dma.hbm_to_vmem [thread:$0]  %s7, 192, %s50, [#allocation5], 64, 64, 4
    $region33: #{forward.1} parent=1 // pred_fallthru
      _
    // Predicated region
    $region34: #{forward.1} parent=1 // pred_check
      _
    $region35: #{forward.1} parent=1 // pred_check_branch
      %57 = sbr.rel (0) target = $region37
    $region36: #{forward.1} parent=1 // pred_region
      _
    $region37: #{forward.1} parent=1 // pred_fallthru
      _
    // Predicated region
    $region38: #{forward.1} parent=1 // pred_check
      _
    $region39: #{forward.1} parent=1 // pred_check_branch
      %59 = sbr.rel (0) target = $region41
    $region40: #{forward.1} parent=1 // pred_region
      _
    $region41: #{forward.1} parent=1 // pred_fallthru
      _
    // Predicated region
    $region42: #{forward.1} parent=1 // pred_check
      _
    $region43: #{forward.1} parent=1 // pred_check_branch
      %61 = sbr.rel (0) target = $region45
    $region44: #{forward.1} parent=1 // pred_region
      _
    $region45: #{forward.1} parent=1 // pred_fallthru
      _
    // Predicated region
    $region46: #{forward.1} parent=1 // pred_check
      _
    $region47: #{forward.1} parent=1 // pred_check_branch
      %63 = sbr.rel (0) target = $region49
    $region48: #{forward.1} parent=1 // pred_region
      _
    $region49: #{forward.1} parent=1 // pred_fallthru
      _
    // Predicated region
    $region50: #{forward.1} parent=1 // pred_check
      _
    $region51: #{forward.1} parent=1 // pred_check_branch
      %65 = sbr.rel (0) target = $region53
    $region52: #{forward.1} parent=1 // pred_region
      _
    $region53: #{forward.1} parent=1 // pred_fallthru
      _
    // Predicated region
    $region54: #{forward.1} parent=1 // pred_check
      _
    $region55: #{forward.1} parent=1 // pred_check_branch
      %67 = sbr.rel (0) target = $region57
    $region56: #{forward.1} parent=1 // pred_region
      %68 = dma.done [#allocation3], 512
    $region57: #{forward.1} parent=1 // pred_fallthru
      _
    // Predicated region
    $region58: #{forward.1} parent=1 // pred_check
      _
    $region59: #{forward.1} parent=1 // pred_check_branch
      %70 = sbr.rel (0) target = $region61
    $region60: #{forward.1} parent=1 // pred_region
      %71 = dma.done [#allocation5], 192
    $region61: #{forward.1} parent=1 // pred_fallthru
      _
    %v73 = vld [vmem:[%s0] sm:$0x3]
    %v74 = vpack.c.bf16 %v73, %v73
    %v75 = vld [vmem:[%s1] sm:$0x3]
    %v76 = vpack.c.bf16 %v75, %v75
    %v77 = vld [vmem:[#allocation2] sm:$0xf]
    %v78 = vld [vmem:[#allocation2 + $0x4] sm:$0xf]
    %v79 = vld [vmem:[#allocation2 + $0x8] sm:$0xf]
    %v80 = vld [vmem:[#allocation2 + $0xc] sm:$0xf]
    %v81 = vld [vmem:[#allocation2 + $0x10] sm:$0xf]
    %v82 = vld [vmem:[#allocation2 + $0x14] sm:$0xf]
    %v83 = vld [vmem:[#allocation2 + $0x18] sm:$0xf]
    %v84 = vld [vmem:[#allocation2 + $0x1c] sm:$0xf]
    %v85 = vld [vmem:[%s8] sm:$0x1]
    %v87 = vlaneseq
    %v88 = vshrl.u32 %v87, 7
    %v89 = vsub.s32 0, %v88
    %v90 = vrot.slane %v85, %v89
    %v100 = vunpack.c.l.b16 %v77
    %v101 = vunpack.c.l.b16 %v78
    %v102 = vunpack.c.l.b16 %v79
    %v103 = vunpack.c.l.b16 %v80
    %v104 = vunpack.c.l.b16 %v81
    %v105 = vunpack.c.l.b16 %v82
    %v106 = vunpack.c.l.b16 %v83
    %v107 = vunpack.c.l.b16 %v84
    %v108 = vpack.c.b16 %v101, %v100
    %v109 = vpack.c.b16 %v103, %v102
    %v110 = vpack.c.b16 %v105, %v104
    %v111 = vpack.c.b16 %v107, %v106
    %vm116 = vcmask 523264
    %v118 = vsel %vm116, %v74, 0
    %120 = vmatprep.subr.bf16.mxu0 0
    %121 = vmatpush1.bf16.msra.mxu0 %v108
    %122 = vmatprep.subr.bf16.mxu0 0
    %123 = vmatpush1.bf16.msra.mxu0 %v109
    %124 = vmatprep.subr.bf16.mxu0 0
    %125 = vmatpush1.bf16.msra.mxu0 %v110
    %126 = vmatprep.subr.bf16.mxu0 0
    %127 = vmatpush1.bf16.msra.mxu0 %v111
    %128 = vmatprep.subr.bf16.mxu0 0
    %129 = vmatpush1.bf16.msra.mxu0 0
    %130 = vmatprep.subr.bf16.mxu0 0
    %131 = vmatpush1.bf16.msra.mxu0 0
    %132 = vmatprep.subr.bf16.mxu0 0
    %133 = vmatpush1.bf16.msra.mxu0 0
    %134 = vmatprep.subr.bf16.mxu0 0
    %135 = vmatpush1.bf16.msra.mxu0 0
    %136 = vmatprep.subr.bf16.mxu0 0
    %137 = vmatpush1.bf16.msra.mxu0 0
    %138 = vmatprep.subr.bf16.mxu0 0
    %139 = vmatpush1.bf16.msra.mxu0 0
    %140 = vmatprep.subr.bf16.mxu0 0
    %141 = vmatpush1.bf16.msra.mxu0 0
    %142 = vmatprep.subr.bf16.mxu0 0
    %143 = vmatpush1.bf16.msra.mxu0 0
    %144 = vmatprep.subr.bf16.mxu0 0
    %145 = vmatpush1.bf16.msra.mxu0 0
    %146 = vmatprep.subr.bf16.mxu0 0
    %147 = vmatpush1.bf16.msra.mxu0 0
    %148 = vmatprep.subr.bf16.mxu0 0
    %149 = vmatpush1.bf16.msra.mxu0 0
    %150 = vmatprep.subr.bf16.mxu0 0
    %151 = vmatpush1.bf16.msra.mxu0 0
    %152 = vmatprep.mubr.bf16.mxu0 0
    %153 = vmatmul.mubr.bf16.gmra.mrb[0].mxu0 %v118
    %v154 = vpop.f32.mrb[0].mxu0
    %v155 = vadd.f32 %v90, %v154
    %v156 = vpop.f32.mrb[0].mxu0
    %v157 = vpop.f32.mrb[0].mxu0
    %v158 = vpop.f32.mrb[0].mxu0
    %159 = vdwg.mxu0
    %v160 = vmax.f32 %v155, 0.0
    %v161 = vpack.c.bf16 %v160, %v160
    %v162 = vld [vmem:[%s4] sm:$0xf]
    %v163 = vld [vmem:[%s4 + $0x4] sm:$0xf]
    %v164 = vld [vmem:[%s4 + $0x8] sm:$0xf]
    %v165 = vld [vmem:[%s4 + $0xc] sm:$0xf]
    %v166 = vld [vmem:[%s4 + $0x10] sm:$0xf]
    %v167 = vld [vmem:[%s4 + $0x14] sm:$0xf]
    %v168 = vld [vmem:[%s4 + $0x18] sm:$0xf]
    %v169 = vld [vmem:[%s4 + $0x1c] sm:$0xf]
    %v170 = vld [vmem:[%s5] sm:$0xf]
    %v171 = vld [vmem:[%s5 + $0x4] sm:$0xf]
    %v172 = vld [vmem:[%s5 + $0x8] sm:$0xf]
    %v173 = vld [vmem:[%s5 + $0xc] sm:$0xf]
    %v174 = vld [vmem:[%s5 + $0x10] sm:$0xf]
    %v175 = vld [vmem:[%s5 + $0x14] sm:$0xf]
    %v176 = vld [vmem:[%s5 + $0x18] sm:$0xf]
    %v177 = vld [vmem:[%s5 + $0x1c] sm:$0xf]
    %v186 = vunpack.c.l.b16 %v170
    %v187 = vunpack.c.l.b16 %v171
    %v188 = vunpack.c.l.b16 %v172
    %v189 = vunpack.c.l.b16 %v173
    %v190 = vunpack.c.l.b16 %v174
    %v191 = vunpack.c.l.b16 %v175
    %v192 = vunpack.c.l.b16 %v176
    %v193 = vunpack.c.l.b16 %v177
    %v194 = vpack.c.b16 %v187, %v186
    %v195 = vpack.c.b16 %v189, %v188
    %v196 = vpack.c.b16 %v191, %v190
    %v197 = vpack.c.b16 %v193, %v192
    %v203 = vsel %vm116, %v76, 0
    %205 = vmatprep.subr.bf16.mxu0 0
    %206 = vmatpush1.bf16.msra.mxu0 %v194
    %207 = vmatprep.subr.bf16.mxu0 0
    %208 = vmatpush1.bf16.msra.mxu0 %v195
    %209 = vmatprep.subr.bf16.mxu0 0
    %210 = vmatpush1.bf16.msra.mxu0 %v196
    %211 = vmatprep.subr.bf16.mxu0 0
    %212 = vmatpush1.bf16.msra.mxu0 %v197
    %213 = vmatprep.subr.bf16.mxu0 0
    %214 = vmatpush1.bf16.msra.mxu0 0
    %215 = vmatprep.subr.bf16.mxu0 0
    %216 = vmatpush1.bf16.msra.mxu0 0
    %217 = vmatprep.subr.bf16.mxu0 0
    %218 = vmatpush1.bf16.msra.mxu0 0
    %219 = vmatprep.subr.bf16.mxu0 0
    %220 = vmatpush1.bf16.msra.mxu0 0
    %221 = vmatprep.subr.bf16.mxu0 0
    %222 = vmatpush1.bf16.msra.mxu0 0
    %223 = vmatprep.subr.bf16.mxu0 0
    %224 = vmatpush1.bf16.msra.mxu0 0
    %225 = vmatprep.subr.bf16.mxu0 0
    %226 = vmatpush1.bf16.msra.mxu0 0
    %227 = vmatprep.subr.bf16.mxu0 0
    %228 = vmatpush1.bf16.msra.mxu0 0
    %229 = vmatprep.subr.bf16.mxu0 0
    %230 = vmatpush1.bf16.msra.mxu0 0
    %231 = vmatprep.subr.bf16.mxu0 0
    %232 = vmatpush1.bf16.msra.mxu0 0
    %233 = vmatprep.subr.bf16.mxu0 0
    %234 = vmatpush1.bf16.msra.mxu0 0
    %235 = vmatprep.subr.bf16.mxu0 0
    %236 = vmatpush1.bf16.msra.mxu0 0
    %237 = vmatprep.mubr.bf16.mxu0 0
    %238 = vmatmul.mubr.bf16.gmra.mrb[0].mxu0 %v203
    %v239 = vpop.f32.mrb[0].mxu0
    %v240 = vadd.f32 0.0, %v239
    %v241 = vpop.f32.mrb[0].mxu0
    %v242 = vpop.f32.mrb[0].mxu0
    %v243 = vpop.f32.mrb[0].mxu0
    %244 = vdwg.mxu0
    %v253 = vunpack.c.l.b16 %v162
    %v254 = vunpack.c.l.b16 %v163
    %v255 = vunpack.c.l.b16 %v164
    %v256 = vunpack.c.l.b16 %v165
    %v257 = vunpack.c.l.b16 %v166
    %v258 = vunpack.c.l.b16 %v167
    %v259 = vunpack.c.l.b16 %v168
    %v260 = vunpack.c.l.b16 %v169
    %v261 = vpack.c.b16 %v254, %v253
    %v262 = vpack.c.b16 %v256, %v255
    %v263 = vpack.c.b16 %v258, %v257
    %v264 = vpack.c.b16 %v260, %v259
    %v270 = vsel %vm116, %v161, 0
    %272 = vmatprep.subr.bf16.mxu0 0
    %273 = vmatpush1.bf16.msra.mxu0 %v261
    %274 = vmatprep.subr.bf16.mxu0 0
    %275 = vmatpush1.bf16.msra.mxu0 %v262
    %276 = vmatprep.subr.bf16.mxu0 0
    %277 = vmatpush1.bf16.msra.mxu0 %v263
    %278 = vmatprep.subr.bf16.mxu0 0
    %279 = vmatpush1.bf16.msra.mxu0 %v264
    %280 = vmatprep.subr.bf16.mxu0 0
    %281 = vmatpush1.bf16.msra.mxu0 0
    %282 = vmatprep.subr.bf16.mxu0 0
    %283 = vmatpush1.bf16.msra.mxu0 0
    %284 = vmatprep.subr.bf16.mxu0 0
    %285 = vmatpush1.bf16.msra.mxu0 0
    %286 = vmatprep.subr.bf16.mxu0 0
    %287 = vmatpush1.bf16.msra.mxu0 0
    %288 = vmatprep.subr.bf16.mxu0 0
    %289 = vmatpush1.bf16.msra.mxu0 0
    %290 = vmatprep.subr.bf16.mxu0 0
    %291 = vmatpush1.bf16.msra.mxu0 0
    %292 = vmatprep.subr.bf16.mxu0 0
    %293 = vmatpush1.bf16.msra.mxu0 0
    %294 = vmatprep.subr.bf16.mxu0 0
    %295 = vmatpush1.bf16.msra.mxu0 0
    %296 = vmatprep.subr.bf16.mxu0 0
    %297 = vmatpush1.bf16.msra.mxu0 0
    %298 = vmatprep.subr.bf16.mxu0 0
    %299 = vmatpush1.bf16.msra.mxu0 0
    %300 = vmatprep.subr.bf16.mxu0 0
    %301 = vmatpush1.bf16.msra.mxu0 0
    %302 = vmatprep.subr.bf16.mxu0 0
    %303 = vmatpush1.bf16.msra.mxu0 0
    %304 = vmatprep.mubr.bf16.mxu0 0
    %305 = vmatmul.mubr.bf16.gmra.mrb[0].mxu0 %v270
    %v306 = vpop.f32.mrb[0].mxu0
    %v307 = vadd.f32 %v240, %v306
    %v308 = vpop.f32.mrb[0].mxu0
    %v309 = vpop.f32.mrb[0].mxu0
    %v310 = vpop.f32.mrb[0].mxu0
    %311 = vdwg.mxu0
    %v312 = vld [vmem:[%s9] sm:$0x1]
    %v314 = vlaneseq
    %v315 = vshrl.u32 %v314, 7
    %v316 = vsub.s32 0, %v315
    %v317 = vrot.slane %v312, %v316
    %v319 = vadd.f32 %v307, %v317
    %v320 = vmax.f32 %v319, 0.0
    %v321 = vpack.c.bf16 %v320, %v320
    %v322 = vld [vmem:[%s6] sm:$0xf]
    %v323 = vld [vmem:[%s6 + $0x4] sm:$0xf]
    %v324 = vld [vmem:[%s10] sm:$0x1]
    %v326 = vlaneseq
    %v327 = vshrl.u32 %v326, 7
    %v328 = vsub.s32 0, %v327
    %v329 = vrot.slane %v324, %v328
    %v333 = vunpack.c.l.b16 %v322
    %v334 = vunpack.c.l.b16 %v323
    %v335 = vpack.c.b16 %v334, %v333
    %vm337 = vcmask 130048
    %v339 = vsel %vm337, %v321, 0
    %341 = vmatprep.subr.bf16.mxu0 0
    %342 = vmatpush1.bf16.msra.mxu0 %v335
    %343 = vmatprep.subr.bf16.mxu0 0
    %344 = vmatpush1.bf16.msra.mxu0 0
    %345 = vmatprep.subr.bf16.mxu0 0
    %346 = vmatpush1.bf16.msra.mxu0 0
    %347 = vmatprep.subr.bf16.mxu0 0
    %348 = vmatpush1.bf16.msra.mxu0 0
    %349 = vmatprep.subr.bf16.mxu0 0
    %350 = vmatpush1.bf16.msra.mxu0 0
    %351 = vmatprep.subr.bf16.mxu0 0
    %352 = vmatpush1.bf16.msra.mxu0 0
    %353 = vmatprep.subr.bf16.mxu0 0
    %354 = vmatpush1.bf16.msra.mxu0 0
    %355 = vmatprep.subr.bf16.mxu0 0
    %356 = vmatpush1.bf16.msra.mxu0 0
    %357 = vmatprep.subr.bf16.mxu0 0
    %358 = vmatpush1.bf16.msra.mxu0 0
    %359 = vmatprep.subr.bf16.mxu0 0
    %360 = vmatpush1.bf16.msra.mxu0 0
    %361 = vmatprep.subr.bf16.mxu0 0
    %362 = vmatpush1.bf16.msra.mxu0 0
    %363 = vmatprep.subr.bf16.mxu0 0
    %364 = vmatpush1.bf16.msra.mxu0 0
    %365 = vmatprep.subr.bf16.mxu0 0
    %366 = vmatpush1.bf16.msra.mxu0 0
    %367 = vmatprep.subr.bf16.mxu0 0
    %368 = vmatpush1.bf16.msra.mxu0 0
    %369 = vmatprep.subr.bf16.mxu0 0
    %370 = vmatpush1.bf16.msra.mxu0 0
    %371 = vmatprep.subr.bf16.mxu0 0
    %372 = vmatpush1.bf16.msra.mxu0 0
    %373 = vmatprep.mubr.bf16.mxu0 0
    %374 = vmatmul.mubr.bf16.gmra.mrb[0].mxu0 %v339
    %v375 = vpop.f32.mrb[0].mxu0
    %v376 = vadd.f32 %v329, %v375
    %v377 = vpop.f32.mrb[0].mxu0
    %v378 = vpop.f32.mrb[0].mxu0
    %v379 = vpop.f32.mrb[0].mxu0
    %380 = vdwg.mxu0
    %v381 = vmax.f32 %v376, 0.0
    %v382 = vpack.c.bf16 %v381, %v381
    %v383 = vld [vmem:[#allocation4] sm:$0xf]
    %v384 = vld [vmem:[#allocation4 + $0x4] sm:$0xf]
    %v385 = vld [vmem:[#allocation4 + $0x8] sm:$0x1]
    %v386 = vld [vmem:[%s2] sm:$0x3]
    %v387 = vld [vmem:[%s11] sm:$0x1]
    %389 = vset.pattern.permute.xlu0 0
    %390 = vperm.xlu0 %389, %v386
    %v391 = vpop.permute.xlu0 %390
    %v394 = vlaneseq
    %v395 = vshrl.u32 %v394, 7
    %v396 = vsub.s32 0, %v395
    %v397 = vrot.slane %v387, %v396
    %v399 = vmul.f32 %v391, %v397
    %v403 = vunpack.c.l.b16 %v383
    %v404 = vunpack.c.l.b16 %v384
    %v405 = vunpack.c.l.b16 %v385
    %v406 = vpack.c.b16 %v404, %v403
    %v407 = vpack.c.b16 %v405, %v405
    %vm409 = vcmask 146432
    %v411 = vsel %vm409, %v382, 0
    %vm413 = vcmask 1040384
    %v415 = vsel %vm413, %v407, 0
    %417 = vmatprep.subr.bf16.mxu0 0
    %418 = vmatpush1.bf16.msra.mxu0 %v406
    %419 = vmatprep.subr.bf16.mxu0 0
    %420 = vmatpush1.bf16.msra.mxu0 %v415
    %421 = vmatprep.subr.bf16.mxu0 0
    %422 = vmatpush1.bf16.msra.mxu0 0
    %423 = vmatprep.subr.bf16.mxu0 0
    %424 = vmatpush1.bf16.msra.mxu0 0
    %425 = vmatprep.subr.bf16.mxu0 0
    %426 = vmatpush1.bf16.msra.mxu0 0
    %427 = vmatprep.subr.bf16.mxu0 0
    %428 = vmatpush1.bf16.msra.mxu0 0
    %429 = vmatprep.subr.bf16.mxu0 0
    %430 = vmatpush1.bf16.msra.mxu0 0
    %431 = vmatprep.subr.bf16.mxu0 0
    %432 = vmatpush1.bf16.msra.mxu0 0
    %433 = vmatprep.subr.bf16.mxu0 0
    %434 = vmatpush1.bf16.msra.mxu0 0
    %435 = vmatprep.subr.bf16.mxu0 0
    %436 = vmatpush1.bf16.msra.mxu0 0
    %437 = vmatprep.subr.bf16.mxu0 0
    %438 = vmatpush1.bf16.msra.mxu0 0
    %439 = vmatprep.subr.bf16.mxu0 0
    %440 = vmatpush1.bf16.msra.mxu0 0
    %441 = vmatprep.subr.bf16.mxu0 0
    %442 = vmatpush1.bf16.msra.mxu0 0
    %443 = vmatprep.subr.bf16.mxu0 0
    %444 = vmatpush1.bf16.msra.mxu0 0
    %445 = vmatprep.subr.bf16.mxu0 0
    %446 = vmatpush1.bf16.msra.mxu0 0
    %447 = vmatprep.subr.bf16.mxu0 0
    %448 = vmatpush1.bf16.msra.mxu0 0
    %449 = vmatprep.mubr.bf16.mxu0 0
    %450 = vmatmul.mubr.bf16.gmra.mrb[0].mxu0 %v411
    %v451 = vpop.f32.mrb[0].mxu0
    %v452 = vadd.f32 %v399, %v451
    %v453 = vpop.f32.mrb[0].mxu0
    %v454 = vpop.f32.mrb[0].mxu0
    %v455 = vpop.f32.mrb[0].mxu0
    %456 = vdwg.mxu0
    %v457 = vld [vmem:[%s12] sm:$0x1]
    %v459 = vlaneseq
    %v460 = vshrl.u32 %v459, 7
    %v461 = vsub.s32 0, %v460
    %v462 = vrot.slane %v457, %v461
    %v464 = vadd.f32 %v452, %v462
    %vm465 = vcmask 25600
    %466 = vst.msk [vmem:[%s13] sm:$0x3] %vm465, %v464
    // Predicated region
    $region62: #{forward.1} parent=1 // pred_check
      _
    $region63: #{forward.1} parent=1 // pred_check_branch
      %468 = sbr.rel (0) target = $region65
    $region64: #{forward.1} parent=1 // pred_region
      _
    $region65: #{forward.1} parent=1 // pred_fallthru
      _
    // Predicated region
    $region66: #{forward.1} parent=1 // pred_check
      _
    $region67: #{forward.1} parent=1 // pred_check_branch
      %470 = sbr.rel (0) target = $region69
    $region68: #{forward.1} parent=1 // pred_region
      _
    $region69: #{forward.1} parent=1 // pred_fallthru
      _
    %471 = vsyncpa [#allocation3], 1
    %472 = vsyncpa [#allocation5], 1

</llo_original>
